<compile_context>
chip_gen: v6e
topology: v6e:2x2x1
jax: 0.10.0
libtpu: 0.0.40
codegen_flags: <defaults>
</compile_context>

<pallas_src>
import functools

import jax
import jax.numpy as jnp
from jax.experimental import pallas as pl
from jax.experimental.pallas import tpu as pltpu


def _round_up(x: int, m: int) -> int:
    return ((x + m - 1) // m) * m


def _row_mask(contrib, row_block, tb, n_rows):
    """Zero the (tb,1) per-row contribution for rows >= n_rows (ragged tail).

    Uses jnp.where (select), so NaN/garbage in out-of-bounds rows is cleared.
    """
    row = jax.lax.broadcasted_iota(jnp.int32, contrib.shape, 0) + row_block * tb
    return jnp.where(row < n_rows, contrib, 0.0)


def _ls_ce_kernel_single(pred_ref, target_ref, out_ref, acc_ref, *,
                         n_rows, tb, mask_rows, targets_sum_to_one):
    """Whole class axis in one block per row tile (common case)."""
    i = pl.program_id(0)

    @pl.when(i == 0)
    def _():
        acc_ref[...] = jnp.zeros_like(acc_ref)

    x = pred_ref[...].astype(jnp.float32)    # (tb, C)
    t = target_ref[...].astype(jnp.float32)  # (tb, C)

    # Numerically stable logsumexp along the lane (class) axis.
    m = jnp.max(x, axis=-1, keepdims=True)                               # (tb,1)
    lse = jnp.log(jnp.sum(jnp.exp(x - m), axis=-1, keepdims=True)) + m   # (tb,1)
    tx = jnp.sum(t * x, axis=-1, keepdims=True)                          # (tb,1)
    if targets_sum_to_one:
        t_sum = 1.0   # label-smoothing targets are normalized: skip one pass
    else:
        t_sum = jnp.sum(t, axis=-1, keepdims=True)                       # (tb,1)

    contrib = lse * t_sum - tx                                           # (tb,1)
    if mask_rows:
        contrib = _row_mask(contrib, i, tb, n_rows)
    acc_ref[...] += contrib

    @pl.when(i == pl.num_programs(0) - 1)
    def _():
        total = jnp.sum(acc_ref[...], axis=0, keepdims=True)             # (1,1)
        out_ref[...] = jnp.broadcast_to(total, out_ref.shape)            # (8,128)


def _ls_ce_kernel_chunked(pred_ref, target_ref, out_ref,
                          m_sc, s_sc, tsum_sc, tx_sc, acc_sc, *,
                          n_rows, n_classes, tb, tc,
                          mask_rows, mask_cols, targets_sum_to_one):
    """Class axis chunked (vocab-scale C): online logsumexp per row."""
    i = pl.program_id(0)                 # row block
    j = pl.program_id(1)                 # class chunk (innermost)
    nj = pl.num_programs(1)

    @pl.when((i == 0) & (j == 0))
    def _():
        acc_sc[...] = jnp.zeros_like(acc_sc)

    @pl.when(j == 0)
    def _():
        m_sc[...] = jnp.full_like(m_sc, -jnp.inf)
        s_sc[...] = jnp.zeros_like(s_sc)
        tx_sc[...] = jnp.zeros_like(tx_sc)
        if not targets_sum_to_one:
            tsum_sc[...] = jnp.zeros_like(tsum_sc)

    x = pred_ref[...].astype(jnp.float32)    # (tb, tc)
    t = target_ref[...].astype(jnp.float32)  # (tb, tc)

    if mask_cols:
        col = jax.lax.broadcasted_iota(jnp.int32, x.shape, 1) + j * tc
        cvalid = col < n_classes
        x_max = jnp.where(cvalid, x, -jnp.inf)   # masked lanes vanish in exp
        x_zero = jnp.where(cvalid, x, 0.0)       # avoid 0 * inf/nan in t*x
        t = jnp.where(cvalid, t, 0.0)
    else:
        x_max = x
        x_zero = x

    # Online logsumexp update.
    m_prev = m_sc[...]
    m_new = jnp.maximum(m_prev, jnp.max(x_max, axis=-1, keepdims=True))
    s_sc[...] = s_sc[...] * jnp.exp(m_prev - m_new) + jnp.sum(
        jnp.exp(x_max - m_new), axis=-1, keepdims=True)
    m_sc[...] = m_new
    tx_sc[...] += jnp.sum(t * x_zero, axis=-1, keepdims=True)
    if not targets_sum_to_one:
        tsum_sc[...] += jnp.sum(t, axis=-1, keepdims=True)

    @pl.when(j == nj - 1)
    def _():
        lse = jnp.log(s_sc[...]) + m_sc[...]
        t_sum = 1.0 if targets_sum_to_one else tsum_sc[...]
        contrib = lse * t_sum - tx_sc[...]
        if mask_rows:
            contrib = _row_mask(contrib, i, tb, n_rows)
        acc_sc[...] += contrib

    @pl.when((i == pl.num_programs(0) - 1) & (j == nj - 1))
    def _():
        total = jnp.sum(acc_sc[...], axis=0, keepdims=True)              # (1,1)
        out_ref[...] = jnp.broadcast_to(total, out_ref.shape)            # (8,128)


def label_smoothing_cross_entropy(pred, target, *, max_tile_rows=2048,
                                  max_tile_cols=None,
                                  targets_sum_to_one=False):
    """pred, target: same shape [..., C]. Returns scalar float32 mean loss."""
    assert pred.shape == target.shape
    C = pred.shape[-1]
    pred2 = pred.reshape(-1, C)
    target2 = target.reshape(-1, C)
    N = pred2.shape[0]

    p_isz = jnp.dtype(pred2.dtype).itemsize
    t_isz = jnp.dtype(target2.dtype).itemsize
    # Sublane multiple for the packed (narrower) dtype: 8 f32, 16 bf16, 32 int8.
    sub = max(8, 32 // p_isz, 32 // t_isz)

    # ---- VMEM budgeting (per-chip, includes f32 upcast temporaries) --------
    try:
        vmem_cap = int(pltpu.get_tpu_info().vmem_capacity_bytes)
    except Exception:  # conservative fallback: safe on v5e / v6e / v7x
        vmem_cap = 64 * 1024 * 1024
    budget = min(vmem_cap // 2, 64 * 1024 * 1024)          # working-set target
    vmem_limit = min(vmem_cap * 3 // 4, 96 * 1024 * 1024)  # scoped VMEM limit
    # double-buffered inputs in native dtype + ~3 f32-sized temporaries
    bytes_per_elem = 2 * (p_isz + t_isz) + 3 * 4

    full_c_row_bytes = C * bytes_per_elem
    chunk_classes = (full_c_row_bytes * sub > budget) or (
        max_tile_cols is not None and max_tile_cols < C)

    out_shape = jax.ShapeDtypeStruct((8, 128), jnp.float32)

    if not chunk_classes:
        # Whole class axis per block; size the row tile from the VMEM budget.
        tb = budget // full_c_row_bytes
        if max_tile_rows is not None:
            tb = min(tb, max_tile_rows)
        tb = max(sub, (tb // sub) * sub)
        tb = min(tb, _round_up(N, sub))
        n_row_blocks = pl.cdiv(N, tb)
        mask_rows = (N % tb) != 0

        kernel = functools.partial(
            _ls_ce_kernel_single, n_rows=N, tb=tb, mask_rows=mask_rows,
            targets_sum_to_one=targets_sum_to_one)

        out = pl.pallas_call(
            kernel,
            out_shape=out_shape,
            grid_spec=pltpu.PrefetchScalarGridSpec(
                num_scalar_prefetch=0,
                grid=(n_row_blocks,),
                in_specs=[pl.BlockSpec((tb, C), lambda i: (i, 0)),
                          pl.BlockSpec((tb, C), lambda i: (i, 0))],
                out_specs=pl.BlockSpec((8, 128), lambda i: (0, 0)),
                scratch_shapes=[pltpu.VMEM((tb, 1), jnp.float32)],
            ),
            compiler_params=pltpu.CompilerParams(
                dimension_semantics=("arbitrary",),
                vmem_limit_bytes=vmem_limit,
            ),
        )(pred2, target2)
    else:
        # Vocab-scale C (or forced): chunk the class axis, online logsumexp.
        tb_req = max_tile_rows if max_tile_rows is not None else 256
        tb = max(sub, (tb_req // sub) * sub)
        tb = min(tb, _round_up(N, sub))

        tc = budget // max(1, tb * bytes_per_elem)
        tc = max(128, (tc // 128) * 128)
        if max_tile_cols is not None:
            tc = min(tc, max(128, (max_tile_cols // 128) * 128))
        tc = min(tc, _round_up(C, 128))

        n_row_blocks = pl.cdiv(N, tb)
        n_class_blocks = pl.cdiv(C, tc)
        mask_rows = (N % tb) != 0
        mask_cols = (C % tc) != 0

        kernel = functools.partial(
            _ls_ce_kernel_chunked, n_rows=N, n_classes=C, tb=tb, tc=tc,
            mask_rows=mask_rows, mask_cols=mask_cols,
            targets_sum_to_one=targets_sum_to_one)

        out = pl.pallas_call(
            kernel,
            out_shape=out_shape,
            grid_spec=pltpu.PrefetchScalarGridSpec(
                num_scalar_prefetch=0,
                grid=(n_row_blocks, n_class_blocks),
                in_specs=[pl.BlockSpec((tb, tc), lambda i, j: (i, j)),
                          pl.BlockSpec((tb, tc), lambda i, j: (i, j))],
                out_specs=pl.BlockSpec((8, 128), lambda i, j: (0, 0)),
                scratch_shapes=[pltpu.VMEM((tb, 1), jnp.float32)] * 5,
            ),
            compiler_params=pltpu.CompilerParams(
                dimension_semantics=("arbitrary", "arbitrary"),
                vmem_limit_bytes=vmem_limit,
            ),
        )(pred2, target2)

    # Mean over the ORIGINAL row count (masked ragged rows contributed 0).
    return out[0, 0] / N


def _reference(pred, target):
    logp = jax.nn.log_softmax(pred.astype(jnp.float32), axis=-1)
    loss = -(target.astype(jnp.float32) * logp).sum(axis=-1)
    return loss.mean()


if __name__ == "__main__":
    key = jax.random.PRNGKey(0)
    k1, k2, k3, k4, k5, k6 = jax.random.split(key, 6)

    # Case 1: [batch, seq, classes] logits, soft (smoothed) targets; full-C path.
    B, S, C = 2, 8, 128
    pred = jax.random.normal(k1, (B, S, C), dtype=jnp.float32)
    raw = jax.random.uniform(k2, (B, S, C), dtype=jnp.float32)
    target = raw / raw.sum(axis=-1, keepdims=True)

    loss = jax.block_until_ready(label_smoothing_cross_entropy(pred, target))
    ref = _reference(pred, target)
    assert jnp.allclose(loss, ref, rtol=1e-5, atol=1e-5), (loss, ref)

    # Same inputs with the normalized-targets fast path (sum(t) == 1).
    loss_n = jax.block_until_ready(
        label_smoothing_cross_entropy(pred, target, targets_sum_to_one=True))
    assert jnp.allclose(loss_n, ref, rtol=1e-5, atol=1e-5), (loss_n, ref)

    # Case 2: ragged N (36 rows, 8-row tiles) -> in-kernel row mask, no padding.
    N2, C2 = 36, 128
    pred_b = jax.random.normal(k3, (N2, C2), dtype=jnp.float32)
    raw_b = jax.random.uniform(k4, (N2, C2), dtype=jnp.float32)
    target_b = raw_b / raw_b.sum(axis=-1, keepdims=True)
    loss_b = jax.block_until_ready(
        label_smoothing_cross_entropy(pred_b, target_b, max_tile_rows=8))
    ref_b = _reference(pred_b, target_b)
    assert jnp.allclose(loss_b, ref_b, rtol=1e-5, atol=1e-5), (loss_b, ref_b)

    # Case 3: class-chunked online-logsumexp path with ragged rows AND a
    # ragged last class chunk (320 = 2*128 + 64).
    N3, C3 = 20, 320
    pred_c = jax.random.normal(k5, (N3, C3), dtype=jnp.float32)
    raw_c = jax.random.uniform(k6, (N3, C3), dtype=jnp.float32)
    target_c = raw_c / raw_c.sum(axis=-1, keepdims=True)
    loss_c = jax.block_until_ready(
        label_smoothing_cross_entropy(pred_c, target_c,
                                      max_tile_rows=8, max_tile_cols=128))
    ref_c = _reference(pred_c, target_c)
    assert jnp.allclose(loss_c, ref_c, rtol=1e-5, atol=1e-5), (loss_c, ref_c)

    print("KERNEL_OK")
</pallas_src>

<mosaic_0001>
module attributes {stable_mosaic.version = 11 : i64} {
  func.func @_ls_ce_kernel_single(%arg0: i32, %arg1: memref<16x128xf32, #tpu.memory_space<vmem>>, %arg2: memref<16x128xf32, #tpu.memory_space<vmem>>, %arg3: memref<8x128xf32, #tpu.memory_space<vmem>>, %arg4: memref<16x1xf32, #tpu.memory_space<vmem>>) attributes {dimension_semantics = [#tpu.dimension_semantics<arbitrary>], iteration_bounds = array<i64: 1>, scalar_prefetch = 0 : i64, scratch_operands = 1 : i64, tpu.core_type = #tpu.core_type<tc>, window_params = [{transform_indices = @transform_0, window_bounds = array<i64: 16, 128>}, {transform_indices = @transform_1, window_bounds = array<i64: 16, 128>}, {pipeline_mode = #tpu.pipeline_mode<synchronous>, transform_indices = @transform_2, window_bounds = array<i64: 8, 128>}]} {
    %c0_i32 = arith.constant 0 : i32
    %0 = arith.cmpi eq, %arg0, %c0_i32 : i32
    %1 = arith.extui %0 : i1 to i32
    %c0_i32_0 = arith.constant 0 : i32
    %2 = arith.cmpi ne, %1, %c0_i32_0 : i32
    scf.if %2 {
      %cst_13 = arith.constant 0.000000e+00 : f32
      %27 = vector.broadcast %cst_13 : f32 to vector<16x1xf32>
      %c0_14 = arith.constant 0 : index
      %c0_15 = arith.constant 0 : index
      %28 = vector.load %arg4[%c0_14, %c0_15] : memref<16x1xf32, #tpu.memory_space<vmem>>, vector<16x1xf32>
      tpu.vector_store %arg4[%c0_14, %c0_15], %27 {strides = array<i32>} : memref<16x1xf32, #tpu.memory_space<vmem>>, vector<16x1xf32>,
    } else {
    }
    %c0 = arith.constant 0 : index
    %c0_1 = arith.constant 0 : index
    %3 = vector.load %arg1[%c0, %c0_1] : memref<16x128xf32, #tpu.memory_space<vmem>>, vector<16x128xf32>
    %c0_2 = arith.constant 0 : index
    %c0_3 = arith.constant 0 : index
    %4 = vector.load %arg2[%c0_2, %c0_3] : memref<16x128xf32, #tpu.memory_space<vmem>>, vector<16x128xf32>
    %cst = arith.constant dense<0xFF800000> : vector<16xf32>
    %5 = vector.multi_reduction <maximumf>, %3, %cst [1] : vector<16x128xf32> to vector<16xf32>
    %6 = vector.shape_cast %5 : vector<16xf32> to vector<16x1xf32>
    %7 = vector.broadcast %6 : vector<16x1xf32> to vector<16x128xf32>
    %8 = arith.subf %3, %7 : vector<16x128xf32>
    %9 = math.exp %8 : vector<16x128xf32>
    %cst_4 = arith.constant dense<0.000000e+00> : vector<16xf32>
    %10 = vector.multi_reduction <add>, %9, %cst_4 [1] : vector<16x128xf32> to vector<16xf32>
    %11 = vector.shape_cast %10 : vector<16xf32> to vector<16x1xf32>
    %12 = math.log %11 : vector<16x1xf32>
    %13 = arith.addf %12, %6 : vector<16x1xf32>
    %14 = arith.mulf %4, %3 : vector<16x128xf32>
    %cst_5 = arith.constant dense<0.000000e+00> : vector<16xf32>
    %15 = vector.multi_reduction <add>, %14, %cst_5 [1] : vector<16x128xf32> to vector<16xf32>
    %16 = vector.shape_cast %15 : vector<16xf32> to vector<16x1xf32>
    %cst_6 = arith.constant dense<0.000000e+00> : vector<16xf32>
    %17 = vector.multi_reduction <add>, %4, %cst_6 [1] : vector<16x128xf32> to vector<16xf32>
    %18 = vector.shape_cast %17 : vector<16xf32> to vector<16x1xf32>
    %19 = arith.mulf %13, %18 : vector<16x1xf32>
    %20 = arith.subf %19, %16 : vector<16x1xf32>
    %c0_7 = arith.constant 0 : index
    %c0_8 = arith.constant 0 : index
    %21 = vector.load %arg4[%c0_7, %c0_8] : memref<16x1xf32, #tpu.memory_space<vmem>>, vector<16x1xf32>
    %22 = arith.addf %21, %20 : vector<16x1xf32>
    %c0_9 = arith.constant 0 : index
    %c0_10 = arith.constant 0 : index
    %23 = vector.load %arg4[%c0_9, %c0_10] : memref<16x1xf32, #tpu.memory_space<vmem>>, vector<16x1xf32>
    tpu.vector_store %arg4[%c0_9, %c0_10], %22 {strides = array<i32>} : memref<16x1xf32, #tpu.memory_space<vmem>>, vector<16x1xf32>,
    %c0_i32_11 = arith.constant 0 : i32
    %24 = arith.cmpi eq, %arg0, %c0_i32_11 : i32
    %25 = arith.extui %24 : i1 to i32
    %c0_i32_12 = arith.constant 0 : i32
    %26 = arith.cmpi ne, %25, %c0_i32_12 : i32
    scf.if %26 {
      %c0_13 = arith.constant 0 : index
      %c0_14 = arith.constant 0 : index
      %27 = vector.load %arg4[%c0_13, %c0_14] : memref<16x1xf32, #tpu.memory_space<vmem>>, vector<16x1xf32>
      %cst_15 = arith.constant dense<0.000000e+00> : vector<1xf32>
      %28 = vector.multi_reduction <add>, %27, %cst_15 [0] : vector<16x1xf32> to vector<1xf32>
      %29 = vector.shape_cast %28 : vector<1xf32> to vector<1x1xf32>
      %30 = vector.shape_cast %29 : vector<1x1xf32> to vector<1x1xf32>
      %31 = vector.broadcast %30 : vector<1x1xf32> to vector<8x128xf32>
      %c0_16 = arith.constant 0 : index
      %c0_17 = arith.constant 0 : index
      %32 = vector.load %arg3[%c0_16, %c0_17] : memref<8x128xf32, #tpu.memory_space<vmem>>, vector<8x128xf32>
      tpu.vector_store %arg3[%c0_16, %c0_17], %31 {strides = array<i32>} : memref<8x128xf32, #tpu.memory_space<vmem>>, vector<8x128xf32>,
    } else {
    }
    return
  }
  func.func @transform_0(%arg0: i32) -> (i32, i32) {
    %c0_i32 = arith.constant 0 : i32
    %c0_i32_0 = arith.constant 0 : i32
    return %arg0, %c0_i32 : i32, i32
  }
  func.func @transform_1(%arg0: i32) -> (i32, i32) {
    %c0_i32 = arith.constant 0 : i32
    %c0_i32_0 = arith.constant 0 : i32
    return %arg0, %c0_i32 : i32, i32
  }
  func.func @transform_2(%arg0: i32) -> (i32, i32) {
    %c0_i32 = arith.constant 0 : i32
    %c0_i32_0 = arith.constant 0 : i32
    %c0_i32_1 = arith.constant 0 : i32
    return %c0_i32, %c0_i32_0 : i32, i32
  }
}

</mosaic_0001>

<llo_original>
// kernel: tpu_custom_call.1
$region0: #{tpu_custom_call.1}
  #allocation0 [shape = 'u32[]', space=smem, size = 0x4, offset = 0x4, fixed_abs, tag = 'smem constant byte address 0x4 - core index']
  #allocation1 [shape = 'u32[144,128]{1,0:T(1,128)}', space=vmem, size = 0x12000, scoped, tag = 'internal scratch']
  #allocation2 [shape = 'f32[16,1]{1,0:T(8,128)}', space=vmem, size = 0x2000, scoped, tag = 'scratch operand']
  %s0 = inlined_call_operand.hbm [shape: f32[16,128], index: 0, kind: input, shape index: {}]
  %s1 = inlined_call_operand.hbm [shape: f32[16,128], index: 1, kind: input, shape index: {}]
  %s2 = inlined_call_operand.hbm [shape: f32[8,128], index: 2, kind: output, shape index: {}]
  %s3 = sld [smem:[#allocation0]]
  $region34: #{tpu_custom_call.1} parent=0
    _
  %s5 = ssub.s32 1, %s3
  %s6 = scalar_select 0, %s5, %s3
  $region1: #{tpu_custom_call.1} parent=0
    #allocation3 [shape = 'u8[8192]{0}', space=vmem, size = 0x2000, scoped, tag = 'input window, operand 0, single buffered']
    #allocation4 [shape = 's32[1]{0}', space=sflag, size = 0x4, scoped, tag = 'scoped memory for tpu_custom_call.1']
    #allocation5 [shape = 's32[1]{0}', space=sflag, size = 0x4, scoped, tag = 'scoped memory for tpu_custom_call.1']
    #allocation6 [shape = 'u8[8192]{0}', space=vmem, size = 0x2000, scoped, tag = 'input window, operand 1, single buffered']
    #allocation7 [shape = 's32[1]{0}', space=sflag, size = 0x4, scoped, tag = 'scoped memory for tpu_custom_call.1']
    #allocation8 [shape = 'u8[4096]{0}', space=vmem, size = 0x1000, scoped, tag = 'output window, operand 0, single buffered']
    %7 = vsyncpa [#allocation4], 0
    %8 = vsyncpa [#allocation7], 0
    %9 = vsyncpa [#allocation5], 0
    // Predicated region
    $region2: #{tpu_custom_call.1} parent=1 // pred_check
      _
    $region3: #{tpu_custom_call.1} parent=1 // pred_check_branch
      %11 = sbr.rel (0) target = $region5
    $region4: #{tpu_custom_call.1} parent=1 // pred_region
      %s13 = ssub.s32 256, 256
      %14 = vsyncadd [#allocation4], %s13
      %s15 = sshll.u32 [#allocation3], 4
      %s16 = int_to_ptr.vmem [resolvable:$true] %s15
      %21 = dma.hbm_to_vmem [thread:$0]  %s0, 256, %s16, [#allocation4], 128, 128, 8
    $region5: #{tpu_custom_call.1} parent=1 // pred_fallthru
      _
    // Predicated region
    $region6: #{tpu_custom_call.1} parent=1 // pred_check
      _
    $region7: #{tpu_custom_call.1} parent=1 // pred_check_branch
      %23 = sbr.rel (0) target = $region9
    $region8: #{tpu_custom_call.1} parent=1 // pred_region
      %s25 = ssub.s32 256, 256
      %26 = vsyncadd [#allocation7], %s25
      %s27 = sshll.u32 [#allocation6], 4
      %s28 = int_to_ptr.vmem [resolvable:$true] %s27
      %33 = dma.hbm_to_vmem [thread:$0]  %s1, 256, %s28, [#allocation7], 128, 128, 8
    $region9: #{tpu_custom_call.1} parent=1 // pred_fallthru
      _
    // Predicated region
    $region10: #{tpu_custom_call.1} parent=1 // pred_check
      _
    $region11: #{tpu_custom_call.1} parent=1 // pred_check_branch
      %35 = sbr.rel (0) target = $region13
    $region12: #{tpu_custom_call.1} parent=1 // pred_region
      %36 = dma.done [#allocation4], 256
    $region13: #{tpu_custom_call.1} parent=1 // pred_fallthru
      _
    // Predicated region
    $region14: #{tpu_custom_call.1} parent=1 // pred_check
      _
    $region15: #{tpu_custom_call.1} parent=1 // pred_check_branch
      %38 = sbr.rel (0) target = $region17
    $region16: #{tpu_custom_call.1} parent=1 // pred_region
      %39 = dma.done [#allocation7], 256
    $region17: #{tpu_custom_call.1} parent=1 // pred_fallthru
      _
    %p40 = scmp.eq.s32.totalorder 0, 0
    // Predicated region
    $region18: #{tpu_custom_call.1} parent=1 // pred_check
      %p41 = pneg %p40
    $region19: #{tpu_custom_call.1} parent=1 // pred_check_branch
      %43 = sbr.rel (%p41) target = $region21
    $region20: #{tpu_custom_call.1} parent=1 // pred_region
      %vm44 = vcmask 7168
      %45 = vst.msk [vmem:[#allocation2] sm:$0xff] %vm44, 0.0
      %46 = vst.msk [vmem:[#allocation2 + $0x8] sm:$0xff] %vm44, 0.0
    $region21: #{tpu_custom_call.1} parent=1 // pred_fallthru
      _
    %v47 = vld [vmem:[#allocation3] sm:$0xff]
    %v48 = vld [vmem:[#allocation3 + $0x8] sm:$0xff]
    %v49 = vld [vmem:[#allocation6] sm:$0xff]
    %v50 = vld [vmem:[#allocation6 + $0x8] sm:$0xff]
    %51 = vmax.xlane.f32.xlu0 %v47
    %v52 = vpop.xlane.xlu0 %51
    %53 = vmax.xlane.f32.xlu0 %v48
    %v54 = vpop.xlane.xlu0 %53
    %v55 = vsub.f32 %v47, %v52
    %v56 = vsub.f32 %v48, %v54
    %v57 = vmul.f32 %v55, 1.442695
    %v58 = vpow.pop %v57
    %v59 = vmul.f32 %v56, 1.442695
    %v60 = vpow.pop %v59
    %61 = vadd.xlane.f32.xlu0 %v58
    %v62 = vpop.xlane.xlu0 %61
    %63 = vadd.xlane.f32.xlu0 %v60
    %v64 = vpop.xlane.xlu0 %63
    %v65 = vlog2.pop %v62
    %v66 = vmul.f32 %v65, 0.6931472
    %v67 = vlog2.pop %v64
    %v68 = vmul.f32 %v67, 0.6931472
    %v69 = vadd.f32 %v66, %v52
    %v70 = vadd.f32 %v68, %v54
    %v71 = vmul.f32 %v49, %v47
    %v72 = vmul.f32 %v50, %v48
    %73 = vadd.xlane.f32.xlu0 %v71
    %v74 = vpop.xlane.xlu0 %73
    %75 = vadd.xlane.f32.xlu0 %v72
    %v76 = vpop.xlane.xlu0 %75
    %77 = vadd.xlane.f32.xlu0 %v49
    %v78 = vpop.xlane.xlu0 %77
    %79 = vadd.xlane.f32.xlu0 %v50
    %v80 = vpop.xlane.xlu0 %79
    %v81 = vmul.f32 %v69, %v78
    %v82 = vmul.f32 %v70, %v80
    %v83 = vsub.f32 %v81, %v74
    %v84 = vsub.f32 %v82, %v76
    %v85 = vld [vmem:[#allocation2] sm:$0xff]
    %v86 = vld [vmem:[#allocation2 + $0x8] sm:$0xff]
    %v87 = vadd.f32 %v85, %v83
    %v88 = vadd.f32 %v86, %v84
    %vm89 = vcmask 7168
    %90 = vst.msk [vmem:[#allocation2] sm:$0xff] %vm89, %v87
    %91 = vst.msk [vmem:[#allocation2 + $0x8] sm:$0xff] %vm89, %v88
    // Predicated region
    $region22: #{tpu_custom_call.1} parent=1 // pred_check
      %p92 = pneg %p40
    $region23: #{tpu_custom_call.1} parent=1 // pred_check_branch
      %94 = sbr.rel (%p92) target = $region25
    $region24: #{tpu_custom_call.1} parent=1 // pred_region
      %v95 = vld [vmem:[#allocation2] sm:$0xff]
      %v96 = vld [vmem:[#allocation2 + $0x8] sm:$0xff]
      %v97 = vsel %vm89, %v95, 0.0
      %v98 = vsel %vm89, %v96, 0.0
      %v99 = vadd.f32 %v97, %v98
      %v100 = vrot.slane %v99, 4
      %v101 = vadd.f32 %v99, %v100
      %v102 = vrot.slane %v101, 2
      %v103 = vadd.f32 %v101, %v102
      %v104 = vrot.slane %v103, 1
      %v105 = vadd.f32 %v103, %v104
      %107 = vset.pattern.permute.xlu0 0
      %108 = vperm.xlu0 %107, %v105
      %v109 = vpop.permute.xlu0 %108
      %111 = vst [vmem:[#allocation8] sm:$0xff] %v109
    $region25: #{tpu_custom_call.1} parent=1 // pred_fallthru
      _
    // Predicated region
    $region26: #{tpu_custom_call.1} parent=1 // pred_check
      _
    $region27: #{tpu_custom_call.1} parent=1 // pred_check_branch
      %113 = sbr.rel (0) target = $region29
    $region28: #{tpu_custom_call.1} parent=1 // pred_region
      %s115 = ssub.s32 128, 128
      %116 = vsyncadd [#allocation5], %s115
      %s118 = sshll.u32 [#allocation8], 4
      %s119 = int_to_ptr.vmem [resolvable:$true] %s118
      %121 = dma.vmem_to_hbm [thread:$0]  %s119, 128, %s2, [#allocation5]
    $region29: #{tpu_custom_call.1} parent=1 // pred_fallthru
      _
    // Predicated region
    $region30: #{tpu_custom_call.1} parent=1 // pred_check
      _
    $region31: #{tpu_custom_call.1} parent=1 // pred_check_branch
      %123 = sbr.rel (0) target = $region33
    $region32: #{tpu_custom_call.1} parent=1 // pred_region
      %124 = dma.done [#allocation5], 128
    $region33: #{tpu_custom_call.1} parent=1 // pred_fallthru
      _
    %125 = vsyncpa [#allocation4], 1
    %126 = vsyncpa [#allocation7], 1
    %127 = vsyncpa [#allocation5], 1

</llo_original>
